<compile_context>
chip_gen: v5e
topology: v5e:2x2
jax: 0.10.0
libtpu: 0.0.40
codegen_flags: <defaults>
</compile_context>

<pallas_src>
import functools

import jax
import jax.numpy as jnp
from jax.experimental import pallas as pl
from jax.experimental.pallas import tpu as pltpu


# Safe on every generation: <= 64 MiB physical VMEM (v7x), well under 128 MiB (v5e/v6e).
_VMEM_LIMIT_BYTES = 48 * 1024 * 1024
# Budget for the pipelined inputs: 2 inputs x 2 pipeline buffers of (Bt, D).
_INPUT_BUFFER_BUDGET_BYTES = 24 * 1024 * 1024


def _contrastive_loss_kernel(o1_ref, o2_ref, label_ref, per_row_ref, *,
                             margin, true_batch, block_rows):
    """One batch tile: per-row contrastive loss -> (block_rows, 1) f32."""
    eps = jnp.float32(1e-6)  # matches F.pairwise_distance default eps
    diff = o1_ref[...].astype(jnp.float32) - o2_ref[...].astype(jnp.float32) + eps

    # Row-wise squared Euclidean distance (lane-axis reduce), keepdim -> (Bt, 1).
    dist_sq = jnp.sum(diff * diff, axis=1, keepdims=True)
    dist = jnp.sqrt(dist_sq)  # EUP sqrt, only needed for the hinge term

    label = label_ref[...].astype(jnp.float32)            # (Bt, 1)
    pos = (1.0 - label) * dist_sq                         # use dist_sq directly
    hinge = jnp.maximum(jnp.float32(margin) - dist, 0.0)
    neg = label * hinge * hinge
    per_row = pos + neg                                   # (Bt, 1)

    # Mask tail rows beyond the true batch size so padded/stale rows contribute 0.
    row = (pl.program_id(0) * block_rows
           + jax.lax.broadcasted_iota(jnp.int32, per_row.shape, 0))
    per_row_ref[...] = jnp.where(row < true_batch, per_row, 0.0)


def _choose_block_rows(batch, feat, itemsize):
    """Largest batch tile that keeps 2 inputs x 2 pipeline buffers in budget."""
    # Minimum sublane tile: 8 rows for 32-bit, 16 for bf16, 32 for 8-bit dtypes.
    min_rows = 8 * max(1, 4 // itemsize)
    if batch <= min_rows:
        return batch  # single block == full array (always a legal block shape)
    per_row_bytes = 4 * feat * itemsize  # 2 inputs x 2 buffers
    bt = (_INPUT_BUFFER_BUDGET_BYTES // per_row_bytes) // min_rows * min_rows
    bt = max(min_rows, bt)
    return min(bt, (batch // min_rows) * min_rows)


def contrastive_loss(output1, output2, label, margin=2.0, block_rows=None):
    """Pallas TPU implementation of ContrastiveLoss.forward (mean contrastive loss)."""
    B, D = output1.shape
    assert output2.shape == (B, D)
    label = jnp.reshape(label, (B, 1))

    itemsize = jnp.dtype(output1.dtype).itemsize
    if block_rows is None:
        block_rows = _choose_block_rows(B, D, itemsize)
    num_tiles = pl.cdiv(B, block_rows)

    kernel = functools.partial(
        _contrastive_loss_kernel,
        margin=float(margin), true_batch=B, block_rows=block_rows)

    cost = pl.CostEstimate(
        flops=3 * B * D + 10 * B,
        transcendentals=B,  # one sqrt per row
        bytes_accessed=(2 * B * D * itemsize
                        + B * jnp.dtype(label.dtype).itemsize
                        + B * 4),
    )

    per_row = pl.pallas_call(
        kernel,
        out_shape=jax.ShapeDtypeStruct((B, 1), jnp.float32),
        grid=(num_tiles,),
        in_specs=[
            pl.BlockSpec((block_rows, D), lambda i: (i, 0)),
            pl.BlockSpec((block_rows, D), lambda i: (i, 0)),
            pl.BlockSpec((block_rows, 1), lambda i: (i, 0)),
        ],
        out_specs=pl.BlockSpec((block_rows, 1), lambda i: (i, 0)),
        compiler_params=pltpu.CompilerParams(
            # Tiles are fully independent -> shard across both TCs on v7x.
            dimension_semantics=("parallel",),
            vmem_limit_bytes=_VMEM_LIMIT_BYTES,
        ),
        cost_estimate=cost,
    )(output1, output2, label)

    # Tiny final reduction (B floats) in XLA; divide by the true batch size.
    return jnp.sum(per_row) / jnp.float32(B)


def _contrastive_loss_ref(output1, output2, label, margin=2.0):
    # Pure-JAX reference mirroring the PyTorch semantics.
    eps = 1e-6
    diff = output1.astype(jnp.float32) - output2.astype(jnp.float32) + eps
    dist = jnp.sqrt(jnp.sum(diff * diff, axis=1, keepdims=True))  # (B, 1)
    label = jnp.reshape(label, dist.shape).astype(jnp.float32)
    return jnp.mean(
        (1.0 - label) * dist**2 + label * jnp.clip(margin - dist, 0.0, None) ** 2
    )


if __name__ == "__main__":
    key = jax.random.PRNGKey(0)
    k1, k2, k3 = jax.random.split(key, 3)

    # 1) Small siamese-MLP-sized problem (single tile), f32.
    B, D = 8, 32
    o1 = jax.random.normal(k1, (B, D), dtype=jnp.float32)
    o2 = jax.random.normal(k2, (B, D), dtype=jnp.float32)
    lab = jax.random.bernoulli(k3, 0.5, (B, 1)).astype(jnp.float32)

    loss = jax.block_until_ready(contrastive_loss(o1, o2, lab, margin=2.0))
    ref = _contrastive_loss_ref(o1, o2, lab, margin=2.0)
    assert jnp.allclose(loss, ref, rtol=1e-5, atol=1e-5), (loss, ref)

    # 2) Multi-tile path with a ragged tail (B % Bt != 0), f32, forced small tile.
    B2, D2 = 20, 32
    o1b = jax.random.normal(k1, (B2, D2), dtype=jnp.float32)
    o2b = jax.random.normal(k2, (B2, D2), dtype=jnp.float32)
    labb = jax.random.bernoulli(k3, 0.5, (B2, 1)).astype(jnp.float32)
    loss2 = jax.block_until_ready(
        contrastive_loss(o1b, o2b, labb, margin=2.0, block_rows=8))
    ref2 = _contrastive_loss_ref(o1b, o2b, labb, margin=2.0)
    assert jnp.allclose(loss2, ref2, rtol=1e-4, atol=1e-5), (loss2, ref2)

    # 3) bf16 embeddings (halved HBM traffic), auto-chosen tile (16-row sublane packing).
    o1c = o1b.astype(jnp.bfloat16)
    o2c = o2b.astype(jnp.bfloat16)
    loss3 = jax.block_until_ready(contrastive_loss(o1c, o2c, labb, margin=2.0))
    ref3 = _contrastive_loss_ref(o1c, o2c, labb, margin=2.0)
    assert jnp.allclose(loss3, ref3, rtol=1e-4, atol=1e-5), (loss3, ref3)

    print("KERNEL_OK")
</pallas_src>

<mosaic_0001>
module attributes {stable_mosaic.version = 11 : i64} {
  func.func @_contrastive_loss_kernel(%arg0: i32, %arg1: memref<8x32xf32, #tpu.memory_space<vmem>>, %arg2: memref<8x32xf32, #tpu.memory_space<vmem>>, %arg3: memref<8x1xf32, #tpu.memory_space<vmem>>, %arg4: memref<8x1xf32, #tpu.memory_space<vmem>>) attributes {dimension_semantics = [#tpu.dimension_semantics<parallel>], iteration_bounds = array<i64: 1>, scalar_prefetch = 0 : i64, scratch_operands = 0 : i64, tpu.core_type = #tpu.core_type<tc>, window_params = [{transform_indices = @transform_0, window_bounds = array<i64: 8, 32>}, {transform_indices = @transform_1, window_bounds = array<i64: 8, 32>}, {transform_indices = @transform_2, window_bounds = array<i64: 8, 1>}, {transform_indices = @transform_3, window_bounds = array<i64: 8, 1>}]} {
    %c0 = arith.constant 0 : index
    %c0_0 = arith.constant 0 : index
    %0 = vector.load %arg1[%c0, %c0_0] : memref<8x32xf32, #tpu.memory_space<vmem>>, vector<8x32xf32>
    %c0_1 = arith.constant 0 : index
    %c0_2 = arith.constant 0 : index
    %1 = vector.load %arg2[%c0_1, %c0_2] : memref<8x32xf32, #tpu.memory_space<vmem>>, vector<8x32xf32>
    %2 = arith.subf %0, %1 : vector<8x32xf32>
    %cst = arith.constant 9.99999997E-7 : f32
    %3 = vector.broadcast %cst : f32 to vector<8x32xf32>
    %4 = arith.addf %2, %3 : vector<8x32xf32>
    %5 = arith.mulf %4, %4 : vector<8x32xf32>
    %cst_3 = arith.constant dense<0.000000e+00> : vector<8xf32>
    %6 = vector.multi_reduction <add>, %5, %cst_3 [1] : vector<8x32xf32> to vector<8xf32>
    %7 = vector.shape_cast %6 : vector<8xf32> to vector<8x1xf32>
    %8 = math.sqrt %7 : vector<8x1xf32>
    %c0_4 = arith.constant 0 : index
    %c0_5 = arith.constant 0 : index
    %9 = vector.load %arg3[%c0_4, %c0_5] : memref<8x1xf32, #tpu.memory_space<vmem>>, vector<8x1xf32>
    %cst_6 = arith.constant 1.000000e+00 : f32
    %10 = vector.broadcast %cst_6 : f32 to vector<8x1xf32>
    %11 = arith.subf %10, %9 : vector<8x1xf32>
    %12 = arith.mulf %11, %7 : vector<8x1xf32>
    %cst_7 = arith.constant 2.000000e+00 : f32
    %13 = vector.broadcast %cst_7 : f32 to vector<8x1xf32>
    %14 = arith.subf %13, %8 : vector<8x1xf32>
    %cst_8 = arith.constant 0.000000e+00 : f32
    %15 = vector.broadcast %cst_8 : f32 to vector<8x1xf32>
    %16 = arith.maximumf %14, %15 : vector<8x1xf32>
    %17 = arith.mulf %9, %16 : vector<8x1xf32>
    %18 = arith.mulf %17, %16 : vector<8x1xf32>
    %19 = arith.addf %12, %18 : vector<8x1xf32>
    %c8_i32 = arith.constant 8 : i32
    %20 = arith.muli %arg0, %c8_i32 : i32
    %21 = tpu.iota {dimensions = array<i32: 0>} : vector<8x1xi32>
    %22 = vector.broadcast %20 : i32 to vector<8x1xi32>
    %23 = arith.addi %22, %21 : vector<8x1xi32>
    %c8_i32_9 = arith.constant 8 : i32
    %24 = vector.broadcast %c8_i32_9 : i32 to vector<8x1xi32>
    %25 = arith.cmpi slt, %23, %24 : vector<8x1xi32>
    %cst_10 = arith.constant 0.000000e+00 : f32
    %26 = vector.broadcast %cst_10 : f32 to vector<8x1xf32>
    %27 = arith.select %25, %19, %26 : vector<8x1xi1>, vector<8x1xf32>
    %c0_11 = arith.constant 0 : index
    %c0_12 = arith.constant 0 : index
    %28 = vector.load %arg4[%c0_11, %c0_12] : memref<8x1xf32, #tpu.memory_space<vmem>>, vector<8x1xf32>
    tpu.vector_store %arg4[%c0_11, %c0_12], %27 {strides = array<i32>} : memref<8x1xf32, #tpu.memory_space<vmem>>, vector<8x1xf32>,
    return
  }
  func.func @transform_0(%arg0: i32) -> (i32, i32) {
    %c0_i32 = arith.constant 0 : i32
    %c0_i32_0 = arith.constant 0 : i32
    return %arg0, %c0_i32 : i32, i32
  }
  func.func @transform_1(%arg0: i32) -> (i32, i32) {
    %c0_i32 = arith.constant 0 : i32
    %c0_i32_0 = arith.constant 0 : i32
    return %arg0, %c0_i32 : i32, i32
  }
  func.func @transform_2(%arg0: i32) -> (i32, i32) {
    %c0_i32 = arith.constant 0 : i32
    %c0_i32_0 = arith.constant 0 : i32
    return %arg0, %c0_i32 : i32, i32
  }
  func.func @transform_3(%arg0: i32) -> (i32, i32) {
    %c0_i32 = arith.constant 0 : i32
    %c0_i32_0 = arith.constant 0 : i32
    return %arg0, %c0_i32 : i32, i32
  }
}

</mosaic_0001>

<llo_original>
// kernel: tpu_custom_call.1
$region0: #{tpu_custom_call.1}
  #allocation0 [shape = 'u32[]', space=smem, size = 0x4, offset = 0x4, fixed_abs, tag = 'smem constant byte address 0x4 - core index']
  #allocation1 [shape = 'u32[72,128]{1,0:T(1,128)}', space=vmem, size = 0x9000, scoped, tag = 'internal scratch']
  %s0 = inlined_call_operand.vmem [shape: f32[8,32], index: 0, kind: input, shape index: {}]
  %s1 = inlined_call_operand.hbm [shape: f32[8,32], index: 1, kind: input, shape index: {}]
  %s2 = inlined_call_operand.vmem [shape: f32[8,1], index: 2, kind: input, shape index: {}]
  %s3 = inlined_call_operand.vmem [shape: f32[8,1], index: 3, kind: output, shape index: {}]
  %s4 = sld [smem:[#allocation0]]
  $region26: #{tpu_custom_call.1} parent=0
    _
  %s6 = ssub.s32 1, %s4
  %s7 = scalar_select 0, %s6, %s4
  $region1: #{tpu_custom_call.1} parent=0
    #allocation2 [shape = 'u8[4096]{0}', space=vmem, size = 0x1000, scoped, tag = 'input window, operand 1, single buffered']
    #allocation3 [shape = 's32[1]{0}', space=sflag, size = 0x4, scoped, tag = 'scoped memory for tpu_custom_call.1']
    %8 = vsyncpa [#allocation3], 0
    // Predicated region
    $region2: #{tpu_custom_call.1} parent=1 // pred_check
      _
    $region3: #{tpu_custom_call.1} parent=1 // pred_check_branch
      %10 = sbr.rel (0) target = $region5
    $region4: #{tpu_custom_call.1} parent=1 // pred_region
      _
    $region5: #{tpu_custom_call.1} parent=1 // pred_fallthru
      _
    // Predicated region
    $region6: #{tpu_custom_call.1} parent=1 // pred_check
      _
    $region7: #{tpu_custom_call.1} parent=1 // pred_check_branch
      %12 = sbr.rel (0) target = $region9
    $region8: #{tpu_custom_call.1} parent=1 // pred_region
      %14 = vsyncadd [#allocation3], 0
      %s16 = sshll.u32 %s1, 4
      %s17 = int_to_ptr.hbm [resolvable:$true] %s16
      %s18 = sshll.u32 [#allocation2], 4
      %s19 = int_to_ptr.vmem [resolvable:$true] %s18
      %21 = dma.hbm_to_vmem [thread:$0]  %s17, 128, %s19, [#allocation3]
    $region9: #{tpu_custom_call.1} parent=1 // pred_fallthru
      _
    // Predicated region
    $region10: #{tpu_custom_call.1} parent=1 // pred_check
      _
    $region11: #{tpu_custom_call.1} parent=1 // pred_check_branch
      %23 = sbr.rel (0) target = $region13
    $region12: #{tpu_custom_call.1} parent=1 // pred_region
      _
    $region13: #{tpu_custom_call.1} parent=1 // pred_fallthru
      _
    // Predicated region
    $region14: #{tpu_custom_call.1} parent=1 // pred_check
      _
    $region15: #{tpu_custom_call.1} parent=1 // pred_check_branch
      %25 = sbr.rel (0) target = $region17
    $region16: #{tpu_custom_call.1} parent=1 // pred_region
      %27 = dma.done [#allocation3], 128
    $region17: #{tpu_custom_call.1} parent=1 // pred_fallthru
      _
    %v28 = vld [vmem:[%s0] sm:$0xff]
    %v29 = vld [vmem:[#allocation2] sm:$0xff]
    %v30 = vsub.f32 %v28, %v29
    %v31 = vadd.f32 %v30, 1e-06
    %v32 = vmul.f32 %v31, %v31
    %vm33 = vcmask 261120
    %v34 = vsel %vm33, %v32, 0.0
    %35 = vadd.xlane.f32.xlu0 %v34
    %v36 = vpop.xlane.xlu0 %35
    %v37 = vrsqrt.pop %v36
    %v38 = vmul.f32 %v37, %v36
    %v39 = vmul.f32 %v38, %v37
    %v40 = vmul.f32 0.5, %v39
    %v41 = vsub.f32 1.5, %v40
    %v42 = vmul.f32 %v37, %v41
    %v43 = vmul.f32 %v36, %v42
    %vm44 = vcmp.eq.f32.partialorder %v36, inf
    %v45 = vsel %vm44, %v36, %v43
    %vm46 = vcmp.eq.f32.partialorder %v36, 0.0
    %v47 = vand.u32 %v36, 2147483648
    %v48 = vsel %vm46, %v47, %v45
    %v49 = vld [vmem:[%s2] sm:$0xff]
    %v50 = vsub.f32 1.0, %v49
    %v51 = vmul.f32 %v50, %v36
    %v52 = vsub.f32 2.0, %v48
    %v53 = vmax.f32 %v52, 0.0
    %v54 = vmul.f32 %v49, %v53
    %v55 = vmul.f32 %v54, %v53
    %v56 = vadd.f32 %v51, %v55
    %s57 = smul.u32 0, 8
    %v58 = vlaneseq
    %v59 = vshrl.u32 %v58, 7
    %v60 = vstv %s57
    %v61 = vadd.s32 %v60, %v59
    %vm62 = vcmp.lt.s32.totalorder %v61, 8
    %v63 = vsel %vm62, %v56, 0.0
    %vm64 = vcmask 7168
    %65 = vst.msk [vmem:[%s3] sm:$0xff] %vm64, %v63
    // Predicated region
    $region18: #{tpu_custom_call.1} parent=1 // pred_check
      _
    $region19: #{tpu_custom_call.1} parent=1 // pred_check_branch
      %67 = sbr.rel (0) target = $region21
    $region20: #{tpu_custom_call.1} parent=1 // pred_region
      _
    $region21: #{tpu_custom_call.1} parent=1 // pred_fallthru
      _
    // Predicated region
    $region22: #{tpu_custom_call.1} parent=1 // pred_check
      _
    $region23: #{tpu_custom_call.1} parent=1 // pred_check_branch
      %69 = sbr.rel (0) target = $region25
    $region24: #{tpu_custom_call.1} parent=1 // pred_region
      _
    $region25: #{tpu_custom_call.1} parent=1 // pred_fallthru
      _
    %70 = vsyncpa [#allocation3], 1

</llo_original>
